<compile_context>
chip_gen: v7x
topology: tpu7x:2x2x1
jax: 0.10.0
libtpu: 0.0.40
codegen_flags: <defaults>
</compile_context>

<pallas_src>
import jax
import jax.numpy as jnp
from jax.experimental import pallas as pl
from jax.experimental.pallas import tpu as pltpu

_LANES = 128
_MAX_TILE_ROWS = 512  # (512, 128) f32 tile = 256 KiB per input plane


def _custom_loss_kernel(nvalid_ref, o0_ref, o1_ref, t_ref, psum_ref):
    """Partial sum of adj_param * (outputs - onehot)^2 for one row-tile."""
    o0 = o0_ref[...].astype(jnp.float32)          # class-0 scores, (rows, 128)
    o1 = o1_ref[...].astype(jnp.float32)          # class-1 scores, (rows, 128)
    t = t_ref[...].astype(jnp.float32)            # targets,        (rows, 128)
    rows, lanes = o0.shape

    pos = t > 0.0
    tgt0 = jnp.where(pos, 0.0, 1.0)               # one_hot(aim)[:, 0]
    tgt1 = jnp.where(pos, 1.0, 0.0)               # one_hot(aim)[:, 1]
    t1 = jnp.where(pos, 1.0, -1.0)
    t2 = jnp.where(o0 < o1, 1.0, -1.0)            # 2*(o0 < o1) - 1
    x = jnp.abs(t) * (t1 * t2)
    adj = 1.0 - jnp.tanh(0.5 * x)                 # == 2 / (1 + exp(x))

    sq = (o0 - tgt0) ** 2 + (o1 - tgt1) ** 2      # both class terms per sample

    # Mask out padded samples (flat sample index >= true N).
    pid = pl.program_id(0)
    row_ids = jax.lax.broadcasted_iota(jnp.int32, (rows, lanes), 0)
    lane_ids = jax.lax.broadcasted_iota(jnp.int32, (rows, lanes), 1)
    flat_idx = (pid * rows + row_ids) * lanes + lane_ids
    contrib = jnp.where(flat_idx < nvalid_ref[0], sq * adj, 0.0)

    total = jnp.sum(contrib)                      # per-tile partial sum

    # Place the scalar at [0, 0] of this tile's (8, 128) output block.
    r8 = jax.lax.broadcasted_iota(jnp.int32, (8, lanes), 0)
    l8 = jax.lax.broadcasted_iota(jnp.int32, (8, lanes), 1)
    psum_ref[0] = jnp.where((r8 == 0) & (l8 == 0), total, 0.0)


def custom_loss(outputs: jax.Array, targets: jax.Array) -> jax.Array:
    """outputs: [N, 2] (float), targets: [N] (float). Returns scalar adj_mse (f32)."""
    n, c = outputs.shape
    assert c == 2, "CustomLoss expects two-class outputs [N, 2]"

    o0 = outputs[:, 0]
    o1 = outputs[:, 1]
    t = targets.reshape(n)

    rows = -(-n // _LANES)                         # rows of 128 samples
    rows8 = -(-rows // 8) * 8                      # sublane-aligned
    tile_rows = min(_MAX_TILE_ROWS, rows8)
    padded_rows = -(-rows8 // tile_rows) * tile_rows
    num_tiles = padded_rows // tile_rows
    padded_n = padded_rows * _LANES

    def plane(x):
        return jnp.pad(x, (0, padded_n - n)).reshape(padded_rows, _LANES)

    o0p, o1p, tp = plane(o0), plane(o1), plane(t)
    nvalid = jnp.array([n], jnp.int32)

    in_bytes = padded_n * (2 * o0p.dtype.itemsize + tp.dtype.itemsize)
    out_bytes = num_tiles * 8 * _LANES * 4
    cost = pl.CostEstimate(
        flops=16 * n, transcendentals=n, bytes_accessed=in_bytes + out_bytes
    )

    partials = pl.pallas_call(
        _custom_loss_kernel,
        out_shape=jax.ShapeDtypeStruct((num_tiles, 8, _LANES), jnp.float32),
        grid_spec=pltpu.PrefetchScalarGridSpec(
            num_scalar_prefetch=1,
            grid=(num_tiles,),
            in_specs=[
                pl.BlockSpec((tile_rows, _LANES), lambda i, nv: (i, 0)),
                pl.BlockSpec((tile_rows, _LANES), lambda i, nv: (i, 0)),
                pl.BlockSpec((tile_rows, _LANES), lambda i, nv: (i, 0)),
            ],
            out_specs=pl.BlockSpec((1, 8, _LANES), lambda i, nv: (i, 0, 0)),
        ),
        compiler_params=pltpu.CompilerParams(
            dimension_semantics=("parallel",),
            vmem_limit_bytes=32 * 1024 * 1024,
        ),
        cost_estimate=cost,
    )(nvalid, o0p, o1p, tp)

    # Final tiny reduction + division by the TRUE element count (N * 2).
    return jnp.sum(partials) / jnp.float32(n * c)


def _reference_loss(outputs, targets):
    # Pure-JAX mirror of the PyTorch forward (sanity check only).
    o = outputs.astype(jnp.float32)
    t = targets.astype(jnp.float32)
    aim = jnp.where(t > 0, 1, 0)
    t1 = jnp.where(t > 0, 1.0, -1.0)
    t2 = 2.0 * (o[:, 0] < o[:, 1]).astype(jnp.float32) - 1.0
    tt = t1 * t2
    onehot = jax.nn.one_hot(aim, 2, dtype=jnp.float32)
    adj = 2.0 / (1.0 + jnp.exp(jnp.abs(t) * tt))
    return jnp.mean((o - onehot) ** 2 * adj[:, None])


if __name__ == "__main__":
    key = jax.random.PRNGKey(0)
    k1, k2 = jax.random.split(key)

    # Small case consistent with the module's [N, 2] / [N] signature.
    N = 16
    outputs = jax.random.normal(k1, (N, 2), dtype=jnp.float32)
    targets = jax.random.normal(k2, (N,), dtype=jnp.float32) * 2.0
    loss = custom_loss(outputs, targets)
    jax.block_until_ready(loss)
    ref = _reference_loss(outputs, targets)
    assert jnp.allclose(loss, ref, rtol=1e-5, atol=1e-6), (loss, ref)

    # Larger case: exercises the multi-tile grid + padding-mask path.
    k3, k4 = jax.random.split(k2)
    N2 = 70000
    outputs2 = jax.random.normal(k3, (N2, 2), dtype=jnp.float32)
    targets2 = jax.random.normal(k4, (N2,), dtype=jnp.float32) * 2.0
    loss2 = custom_loss(outputs2, targets2)
    jax.block_until_ready(loss2)
    ref2 = _reference_loss(outputs2, targets2)
    assert jnp.allclose(loss2, ref2, rtol=1e-4, atol=1e-6), (loss2, ref2)

    print("KERNEL_OK")
</pallas_src>

<mosaic_0001>
module attributes {stable_mosaic.version = 11 : i64} {
  func.func @_custom_loss_kernel(%arg0: i32, %arg1: memref<1xi32, #tpu.memory_space<smem>>, %arg2: memref<8x128xf32, #tpu.memory_space<vmem>>, %arg3: memref<8x128xf32, #tpu.memory_space<vmem>>, %arg4: memref<8x128xf32, #tpu.memory_space<vmem>>, %arg5: memref<1x8x128xf32, #tpu.memory_space<vmem>>) attributes {dimension_semantics = [#tpu.dimension_semantics<parallel>], iteration_bounds = array<i64: 1>, scalar_prefetch = 1 : i64, scratch_operands = 0 : i64, tpu.core_type = #tpu.core_type<tc>, window_params = [{transform_indices = @transform_0, window_bounds = array<i64: 8, 128>}, {transform_indices = @transform_1, window_bounds = array<i64: 8, 128>}, {transform_indices = @transform_2, window_bounds = array<i64: 8, 128>}, {transform_indices = @transform_3, window_bounds = array<i64: 1, 8, 128>}]} {
    %c0 = arith.constant 0 : index
    %c0_0 = arith.constant 0 : index
    %0 = vector.load %arg2[%c0, %c0_0] : memref<8x128xf32, #tpu.memory_space<vmem>>, vector<8x128xf32>
    %c0_1 = arith.constant 0 : index
    %c0_2 = arith.constant 0 : index
    %1 = vector.load %arg3[%c0_1, %c0_2] : memref<8x128xf32, #tpu.memory_space<vmem>>, vector<8x128xf32>
    %c0_3 = arith.constant 0 : index
    %c0_4 = arith.constant 0 : index
    %2 = vector.load %arg4[%c0_3, %c0_4] : memref<8x128xf32, #tpu.memory_space<vmem>>, vector<8x128xf32>
    %cst = arith.constant 0.000000e+00 : f32
    %3 = vector.broadcast %cst : f32 to vector<8x128xf32>
    %4 = arith.cmpf ogt, %2, %3 : vector<8x128xf32>
    %cst_5 = arith.constant 0.000000e+00 : f32
    %cst_6 = arith.constant 1.000000e+00 : f32
    %5 = vector.broadcast %cst_5 : f32 to vector<8x128xf32>
    %6 = vector.broadcast %cst_6 : f32 to vector<8x128xf32>
    %7 = arith.select %4, %5, %6 : vector<8x128xi1>, vector<8x128xf32>
    %cst_7 = arith.constant 1.000000e+00 : f32
    %cst_8 = arith.constant 0.000000e+00 : f32
    %8 = vector.broadcast %cst_7 : f32 to vector<8x128xf32>
    %9 = vector.broadcast %cst_8 : f32 to vector<8x128xf32>
    %10 = arith.select %4, %8, %9 : vector<8x128xi1>, vector<8x128xf32>
    %cst_9 = arith.constant 1.000000e+00 : f32
    %cst_10 = arith.constant -1.000000e+00 : f32
    %11 = vector.broadcast %cst_9 : f32 to vector<8x128xf32>
    %12 = vector.broadcast %cst_10 : f32 to vector<8x128xf32>
    %13 = arith.select %4, %11, %12 : vector<8x128xi1>, vector<8x128xf32>
    %14 = arith.cmpf olt, %0, %1 : vector<8x128xf32>
    %cst_11 = arith.constant 1.000000e+00 : f32
    %cst_12 = arith.constant -1.000000e+00 : f32
    %15 = vector.broadcast %cst_11 : f32 to vector<8x128xf32>
    %16 = vector.broadcast %cst_12 : f32 to vector<8x128xf32>
    %17 = arith.select %14, %15, %16 : vector<8x128xi1>, vector<8x128xf32>
    %18 = math.absf %2 : vector<8x128xf32>
    %19 = arith.mulf %13, %17 : vector<8x128xf32>
    %20 = arith.mulf %18, %19 : vector<8x128xf32>
    %cst_13 = arith.constant 5.000000e-01 : f32
    %21 = vector.broadcast %cst_13 : f32 to vector<8x128xf32>
    %22 = arith.mulf %21, %20 : vector<8x128xf32>
    %23 = math.tanh %22 : vector<8x128xf32>
    %cst_14 = arith.constant 1.000000e+00 : f32
    %24 = vector.broadcast %cst_14 : f32 to vector<8x128xf32>
    %25 = arith.subf %24, %23 : vector<8x128xf32>
    %26 = arith.subf %0, %7 : vector<8x128xf32>
    %27 = arith.mulf %26, %26 : vector<8x128xf32>
    %28 = arith.subf %1, %10 : vector<8x128xf32>
    %29 = arith.mulf %28, %28 : vector<8x128xf32>
    %30 = arith.addf %27, %29 : vector<8x128xf32>
    %31 = tpu.iota {dimensions = array<i32: 0>} : vector<8x128xi32>
    %32 = tpu.iota {dimensions = array<i32: 1>} : vector<8x128xi32>
    %c8_i32 = arith.constant 8 : i32
    %33 = arith.muli %arg0, %c8_i32 : i32
    %34 = vector.broadcast %33 : i32 to vector<8x128xi32>
    %35 = arith.addi %34, %31 : vector<8x128xi32>
    %c128_i32 = arith.constant 128 : i32
    %36 = vector.broadcast %c128_i32 : i32 to vector<8x128xi32>
    %37 = arith.muli %35, %36 : vector<8x128xi32>
    %38 = arith.addi %37, %32 : vector<8x128xi32>
    %c0_15 = arith.constant 0 : index
    %39 = memref.load %arg1[%c0_15] : memref<1xi32, #tpu.memory_space<smem>>
    %40 = vector.broadcast %39 : i32 to vector<8x128xi32>
    %41 = arith.cmpi slt, %38, %40 : vector<8x128xi32>
    %42 = arith.mulf %30, %25 : vector<8x128xf32>
    %cst_16 = arith.constant 0.000000e+00 : f32
    %43 = vector.broadcast %cst_16 : f32 to vector<8x128xf32>
    %44 = arith.select %41, %42, %43 : vector<8x128xi1>, vector<8x128xf32>
    %45 = vector.shape_cast %44 : vector<8x128xf32> to vector<1x8x128xf32>
    %cst_17 = arith.constant dense<0.000000e+00> : vector<1xf32>
    %46 = vector.multi_reduction <add>, %45, %cst_17 [1, 2] : vector<1x8x128xf32> to vector<1xf32>
    %47 = vector.shape_cast %46 : vector<1xf32> to vector<1x1x1xf32>
    %48 = vector.extract %47[0, 0, 0] : f32 from vector<1x1x1xf32>
    %49 = tpu.iota {dimensions = array<i32: 0>} : vector<8x128xi32>
    %50 = tpu.iota {dimensions = array<i32: 1>} : vector<8x128xi32>
    %c0_i32 = arith.constant 0 : i32
    %51 = vector.broadcast %c0_i32 : i32 to vector<8x128xi32>
    %52 = arith.cmpi eq, %49, %51 : vector<8x128xi32>
    %c0_i32_18 = arith.constant 0 : i32
    %53 = vector.broadcast %c0_i32_18 : i32 to vector<8x128xi32>
    %54 = arith.cmpi eq, %50, %53 : vector<8x128xi32>
    %55 = arith.andi %52, %54 : vector<8x128xi1>
    %cst_19 = arith.constant 0.000000e+00 : f32
    %56 = vector.broadcast %48 : f32 to vector<8x128xf32>
    %57 = vector.broadcast %cst_19 : f32 to vector<8x128xf32>
    %58 = arith.select %55, %56, %57 : vector<8x128xi1>, vector<8x128xf32>
    %c0_20 = arith.constant 0 : index
    %c0_21 = arith.constant 0 : index
    %c0_22 = arith.constant 0 : index
    %59 = vector.load %arg5[%c0_20, %c0_21, %c0_22] : memref<1x8x128xf32, #tpu.memory_space<vmem>>, vector<1x8x128xf32>
    %60 = vector.shape_cast %59 : vector<1x8x128xf32> to vector<8x128xf32>
    %61 = vector.shape_cast %58 : vector<8x128xf32> to vector<1x8x128xf32>
    tpu.vector_store %arg5[%c0_20, %c0_21, %c0_22], %61 {strides = array<i32>} : memref<1x8x128xf32, #tpu.memory_space<vmem>>, vector<1x8x128xf32>,
    return
  }
  func.func @transform_0(%arg0: i32, %arg1: memref<1xi32, #tpu.memory_space<smem>>) -> (i32, i32) {
    %c0_i32 = arith.constant 0 : i32
    %c0_i32_0 = arith.constant 0 : i32
    return %arg0, %c0_i32 : i32, i32
  }
  func.func @transform_1(%arg0: i32, %arg1: memref<1xi32, #tpu.memory_space<smem>>) -> (i32, i32) {
    %c0_i32 = arith.constant 0 : i32
    %c0_i32_0 = arith.constant 0 : i32
    return %arg0, %c0_i32 : i32, i32
  }
  func.func @transform_2(%arg0: i32, %arg1: memref<1xi32, #tpu.memory_space<smem>>) -> (i32, i32) {
    %c0_i32 = arith.constant 0 : i32
    %c0_i32_0 = arith.constant 0 : i32
    return %arg0, %c0_i32 : i32, i32
  }
  func.func @transform_3(%arg0: i32, %arg1: memref<1xi32, #tpu.memory_space<smem>>) -> (i32, i32, i32) {
    %c0_i32 = arith.constant 0 : i32
    %c0_i32_0 = arith.constant 0 : i32
    %c0_i32_1 = arith.constant 0 : i32
    return %arg0, %c0_i32, %c0_i32_0 : i32, i32, i32
  }
}

</mosaic_0001>

<llo_original>
// kernel: tpu_custom_call.1
$region0: #{tpu_custom_call.1}
  #allocation0 [shape = 'u32[]', space=smem, size = 0x4, offset = 0x4, fixed_abs, tag = 'smem constant byte address 0x4 - core index']
  #allocation1 [shape = 'u32[144,128]{1,0:T(1,128)}', space=vmem, size = 0x12000, scoped, tag = 'internal scratch']
  #allocation2 [shape = 's32[1]{0}', space=sflag, size = 0x4, scoped, tag = 'scoped memory for tpu_custom_call.1']
  #allocation3 [shape = 's32[1]{0:T(128)S(6)}', space=smem, size = 0x200, scoped, tag = 'prefetched SMEM operand 0']
  %s0 = inlined_call_operand.<no memory space> [shape: s32[1], index: 0, kind: input, shape index: {}]
  %s1 = inlined_call_operand.hbm [shape: f32[8,128], index: 1, kind: input, shape index: {}]
  %s2 = inlined_call_operand.hbm [shape: f32[8,128], index: 2, kind: input, shape index: {}]
  %s3 = inlined_call_operand.vmem [shape: f32[8,128], index: 3, kind: input, shape index: {}]
  %s4 = inlined_call_operand.hbm [shape: f32[1,8,128], index: 4, kind: output, shape index: {}]
  %s5 = sld [smem:[#allocation0]]
  $region30: #{tpu_custom_call.1} parent=0
    _
  %s7 = ssub.s32 1, %s5
  %s8 = scalar_select 0, %s7, %s5
  %9 = sst [smem:[#allocation3]] %s0
  $region1: #{tpu_custom_call.1} parent=0
    #allocation4 [shape = 'u8[4096]{0}', space=vmem, size = 0x1000, scoped, tag = 'input window, operand 1, single buffered']
    #allocation5 [shape = 's32[1]{0}', space=sflag, size = 0x4, scoped, tag = 'scoped memory for tpu_custom_call.1']
    #allocation6 [shape = 's32[1]{0}', space=sflag, size = 0x4, scoped, tag = 'scoped memory for tpu_custom_call.1']
    #allocation7 [shape = 'u8[4096]{0}', space=vmem, size = 0x1000, scoped, tag = 'input window, operand 2, single buffered']
    #allocation8 [shape = 's32[1]{0}', space=sflag, size = 0x4, scoped, tag = 'scoped memory for tpu_custom_call.1']
    #allocation9 [shape = 'u8[4096]{0}', space=vmem, size = 0x1000, scoped, tag = 'output window, operand 0, single buffered']
    %10 = vsyncpa [#allocation5], 0
    %11 = vsyncpa [#allocation8], 0
    %12 = vsyncpa [#allocation6], 0
    // Predicated region
    $region2: #{tpu_custom_call.1} parent=1 // pred_check
      _
    $region3: #{tpu_custom_call.1} parent=1 // pred_check_branch
      %14 = sbr.rel (0) target = $region5
    $region4: #{tpu_custom_call.1} parent=1 // pred_region
      %s16 = ssub.s32 128, 128
      %17 = vsyncadd [#allocation5], %s16
      %s19 = sshll.u32 [#allocation4], 4
      %s20 = int_to_ptr.vmem [resolvable:$true] %s19
      %22 = dma.hbm_to_vmem [thread:$0]  %s1, 128, %s20, [#allocation5]
    $region5: #{tpu_custom_call.1} parent=1 // pred_fallthru
      _
    // Predicated region
    $region6: #{tpu_custom_call.1} parent=1 // pred_check
      _
    $region7: #{tpu_custom_call.1} parent=1 // pred_check_branch
      %24 = sbr.rel (0) target = $region9
    $region8: #{tpu_custom_call.1} parent=1 // pred_region
      %s26 = ssub.s32 128, 128
      %27 = vsyncadd [#allocation8], %s26
      %s29 = sshll.u32 [#allocation7], 4
      %s30 = int_to_ptr.vmem [resolvable:$true] %s29
      %32 = dma.hbm_to_vmem [thread:$0]  %s2, 128, %s30, [#allocation8]
    $region9: #{tpu_custom_call.1} parent=1 // pred_fallthru
      _
    // Predicated region
    $region10: #{tpu_custom_call.1} parent=1 // pred_check
      _
    $region11: #{tpu_custom_call.1} parent=1 // pred_check_branch
      %34 = sbr.rel (0) target = $region13
    $region12: #{tpu_custom_call.1} parent=1 // pred_region
      _
    $region13: #{tpu_custom_call.1} parent=1 // pred_fallthru
      _
    // Predicated region
    $region14: #{tpu_custom_call.1} parent=1 // pred_check
      _
    $region15: #{tpu_custom_call.1} parent=1 // pred_check_branch
      %36 = sbr.rel (0) target = $region17
    $region16: #{tpu_custom_call.1} parent=1 // pred_region
      %37 = dma.done [#allocation5], 128
    $region17: #{tpu_custom_call.1} parent=1 // pred_fallthru
      _
    // Predicated region
    $region18: #{tpu_custom_call.1} parent=1 // pred_check
      _
    $region19: #{tpu_custom_call.1} parent=1 // pred_check_branch
      %39 = sbr.rel (0) target = $region21
    $region20: #{tpu_custom_call.1} parent=1 // pred_region
      %40 = dma.done [#allocation8], 128
    $region21: #{tpu_custom_call.1} parent=1 // pred_fallthru
      _
    %v41 = vld [vmem:[#allocation4] sm:$0xff]
    %v42 = vld [vmem:[#allocation7] sm:$0xff]
    %v43 = vld [vmem:[%s3] sm:$0xff]
    %vm44 = vcmp.gt.f32.partialorder %v43, 0.0
    %v45 = vsel %vm44, 0.0, 1.0
    %v46 = vsel %vm44, 1.0, 0.0
    %v47 = vsel %vm44, 1.0, -1.0
    %vm48 = vcmp.lt.f32.partialorder %v41, %v42
    %v49 = vsel %vm48, 1.0, -1.0
    %v50 = vand.u32 2147483647, %v43
    %v51 = vmul.f32 %v47, %v49
    %v52 = vmul.f32 %v50, %v51
    %v53 = vmul.f32 %v52, 0.5
    %v54 = vtanh.pop %v53
    %v55 = vsub.f32 1.0, %v54
    %v56 = vsub.f32 %v41, %v45
    %v57 = vmul.f32 %v56, %v56
    %v58 = vsub.f32 %v42, %v46
    %v59 = vmul.f32 %v58, %v58
    %v60 = vadd.f32 %v57, %v59
    %v61 = vlaneseq
    %v62 = vshrl.u32 %v61, 7
    %v63 = vlaneseq
    %v64 = vand.u32 %v63, 127
    %s65 = smul.u32 0, 8
    %v66 = vstv %s65
    %v67 = vadd.s32 %v66, %v62
    %v68 = vmul.u32 %v67, 128
    %v69 = vadd.s32 %v68, %v64
    %s70 = sld [smem:[#allocation3]]
    %v71 = vstv %s70
    %vm72 = vcmp.lt.s32.totalorder %v69, %v71
    %v73 = vmul.f32 %v60, %v55
    %v74 = vsel %vm72, %v73, 0.0
    %75 = vadd.xlane.f32.xlu0 %v74
    %v76 = vpop.xlane.xlu0 %75
    %v77 = vrot.slane %v76, 4
    %v78 = vadd.f32 %v76, %v77
    %v79 = vrot.slane %v78, 2
    %v80 = vadd.f32 %v78, %v79
    %v81 = vrot.slane %v80, 1
    %v82 = vadd.f32 %v80, %v81
    %s83 = vtos %v82
    %vm84 = vcmp.eq.s32.totalorder %v62, 0
    %vm85 = vcmp.eq.s32.totalorder %v64, 0
    %vm86 = vmand %vm84, %vm85
    %v87 = vstv %s83
    %v88 = vsel %vm86, %v87, 0.0
    %89 = vst [vmem:[#allocation9] sm:$0xff] %v88
    // Predicated region
    $region22: #{tpu_custom_call.1} parent=1 // pred_check
      _
    $region23: #{tpu_custom_call.1} parent=1 // pred_check_branch
      %91 = sbr.rel (0) target = $region25
    $region24: #{tpu_custom_call.1} parent=1 // pred_region
      %s93 = ssub.s32 128, 128
      %94 = vsyncadd [#allocation6], %s93
      %s96 = sshll.u32 [#allocation9], 4
      %s97 = int_to_ptr.vmem [resolvable:$true] %s96
      %99 = dma.vmem_to_hbm [thread:$0]  %s97, 128, %s4, [#allocation6]
    $region25: #{tpu_custom_call.1} parent=1 // pred_fallthru
      _
    // Predicated region
    $region26: #{tpu_custom_call.1} parent=1 // pred_check
      _
    $region27: #{tpu_custom_call.1} parent=1 // pred_check_branch
      %101 = sbr.rel (0) target = $region29
    $region28: #{tpu_custom_call.1} parent=1 // pred_region
      %102 = dma.done [#allocation6], 128
    $region29: #{tpu_custom_call.1} parent=1 // pred_fallthru
      _
    %103 = vsyncpa [#allocation5], 1
    %104 = vsyncpa [#allocation8], 1
    %105 = vsyncpa [#allocation6], 1

</llo_original>
